<compile_context>
chip_gen: v6e
topology: v6e:2x2x1
jax: 0.10.0
libtpu: 0.0.40
codegen_flags: <defaults>
</compile_context>

<pallas_src>
import jax
import jax.numpy as jnp
from jax.experimental import pallas as pl
from jax.experimental.pallas import tpu as pltpu


def _round_up(x, m):
    return ((x + m - 1) // m) * m


def _value_kernel(x_ref, w1_ref, b1_ref, w2_ref, b2_ref, wv_ref, bv_ref, o_ref):
    # fc1 + relu (MXU matmul, f32 accumulate)
    h1 = jnp.dot(x_ref[...], w1_ref[...], preferred_element_type=jnp.float32)
    h1 = jnp.maximum(h1 + b1_ref[...], 0.0)
    # fc2 + relu
    h2 = jnp.dot(h1, w2_ref[...], preferred_element_type=jnp.float32)
    h2 = jnp.maximum(h2 + b2_ref[...], 0.0)
    # Value head: output width is 1 -> an MXU pass would use a single result
    # lane and still pay full push/pop latency. Do it on the VPU/XLU instead:
    # broadcast the (1, fc2) weight row, multiply, row-reduce.
    v = jnp.sum(h2 * wv_ref[...], axis=-1, keepdims=True) + bv_ref[...]
    o_ref[...] = v.astype(o_ref.dtype)


def prepare_params(pt_params):
    """Convert PyTorch-layout params to kernel layout ONCE (at load time).

    PyTorch layout:
      fc1_w: (fc1, in), fc1_b: (fc1,)
      fc2_w: (fc2, fc1), fc2_b: (fc2,)
      v_w:   (1, fc2),   v_b:   (1,)
    """
    return {
        "w1": jnp.asarray(pt_params["fc1_w"]).T,          # (in, fc1)
        "b1": jnp.asarray(pt_params["fc1_b"])[None, :],   # (1, fc1)
        "w2": jnp.asarray(pt_params["fc2_w"]).T,          # (fc1, fc2)
        "b2": jnp.asarray(pt_params["fc2_b"])[None, :],   # (1, fc2)
        "wv": jnp.asarray(pt_params["v_w"]),              # (1, fc2) kept as a row
        "bv": jnp.asarray(pt_params["v_b"])[None, :],     # (1, 1)
    }


def value_network_forward(state, kparams, *, tile_batch=512):
    """state: (B, input_dims) f32.  kparams: output of prepare_params()."""
    B, in_dims = state.shape
    w1, b1 = kparams["w1"], kparams["b1"]
    w2, b2 = kparams["w2"], kparams["b2"]
    wv, bv = kparams["wv"], kparams["bv"]
    fc1 = w1.shape[1]
    fc2 = w2.shape[1]

    # Batch tile: multiple of 8 sublanes, capped so double-buffered state tiles
    # plus resident weights stay well under the smallest (v7x) VMEM budget.
    TB = min(tile_batch, _round_up(B, 8))
    B_pad = _round_up(B, TB)
    if B_pad != B:
        state = jnp.pad(state, ((0, B_pad - B), (0, 0)))

    grid = (B_pad // TB,)
    out = pl.pallas_call(
        _value_kernel,
        out_shape=jax.ShapeDtypeStruct((B_pad, 1), jnp.float32),
        grid=grid,
        in_specs=[
            # state: streamed per batch tile
            pl.BlockSpec((TB, in_dims), lambda i: (i, 0)),
            # weights/biases: constant block index -> VMEM-resident across steps
            pl.BlockSpec((in_dims, fc1), lambda i: (0, 0)),
            pl.BlockSpec((1, fc1), lambda i: (0, 0)),
            pl.BlockSpec((fc1, fc2), lambda i: (0, 0)),
            pl.BlockSpec((1, fc2), lambda i: (0, 0)),
            pl.BlockSpec((1, fc2), lambda i: (0, 0)),
            pl.BlockSpec((1, 1), lambda i: (0, 0)),
        ],
        out_specs=pl.BlockSpec((TB, 1), lambda i: (i, 0)),
        compiler_params=pltpu.CompilerParams(
            dimension_semantics=("parallel",),
        ),
    )(state, w1, b1, w2, b2, wv, bv)
    return out[:B]


def _ref_forward(state, pt_params):
    h1 = jnp.maximum(state @ pt_params["fc1_w"].T + pt_params["fc1_b"], 0.0)
    h2 = jnp.maximum(h1 @ pt_params["fc2_w"].T + pt_params["fc2_b"], 0.0)
    return h2 @ pt_params["v_w"].T + pt_params["v_b"]


if __name__ == "__main__":
    # Small shapes consistent with the module (fc1_dims/fc2_dims default 256).
    batch = 2
    input_dims = 16
    fc1_dims = 256
    fc2_dims = 256
    out_dims = 1  # value head (the original's `self.n_actions` is 1 for a value net)

    key = jax.random.PRNGKey(0)
    k_x, k1, k2, k3, k4, k5, k6 = jax.random.split(key, 7)

    state = jax.random.normal(k_x, (batch, input_dims), dtype=jnp.float32)
    pt_params = {
        "fc1_w": jax.random.normal(k1, (fc1_dims, input_dims), dtype=jnp.float32) * 0.1,
        "fc1_b": jax.random.normal(k2, (fc1_dims,), dtype=jnp.float32) * 0.1,
        "fc2_w": jax.random.normal(k3, (fc2_dims, fc1_dims), dtype=jnp.float32) * 0.1,
        "fc2_b": jax.random.normal(k4, (fc2_dims,), dtype=jnp.float32) * 0.1,
        "v_w": jax.random.normal(k5, (out_dims, fc2_dims), dtype=jnp.float32) * 0.1,
        "v_b": jax.random.normal(k6, (out_dims,), dtype=jnp.float32) * 0.1,
    }

    # One-time layout conversion (not in the hot path).
    kparams = prepare_params(pt_params)

    v = value_network_forward(state, kparams)
    jax.block_until_ready(v)

    v_ref = _ref_forward(state, pt_params)
    assert v.shape == (batch, 1), v.shape
    assert jnp.allclose(v, v_ref, atol=1e-5, rtol=1e-5), (v, v_ref)

    print("KERNEL_OK")
</pallas_src>

<mosaic_0001>
module attributes {stable_mosaic.version = 11 : i64} {
  func.func @_value_kernel(%arg0: i32, %arg1: memref<8x16xf32, #tpu.memory_space<vmem>>, %arg2: memref<16x256xf32, #tpu.memory_space<vmem>>, %arg3: memref<1x256xf32, #tpu.memory_space<vmem>>, %arg4: memref<256x256xf32, #tpu.memory_space<vmem>>, %arg5: memref<1x256xf32, #tpu.memory_space<vmem>>, %arg6: memref<1x256xf32, #tpu.memory_space<vmem>>, %arg7: memref<1x1xf32, #tpu.memory_space<vmem>>, %arg8: memref<8x1xf32, #tpu.memory_space<vmem>>) attributes {dimension_semantics = [#tpu.dimension_semantics<parallel>], iteration_bounds = array<i64: 1>, scalar_prefetch = 0 : i64, scratch_operands = 0 : i64, tpu.core_type = #tpu.core_type<tc>, window_params = [{transform_indices = @transform_0, window_bounds = array<i64: 8, 16>}, {pipeline_mode = #tpu.pipeline_mode<synchronous>, transform_indices = @transform_1, window_bounds = array<i64: 16, 256>}, {pipeline_mode = #tpu.pipeline_mode<synchronous>, transform_indices = @transform_2, window_bounds = array<i64: 1, 256>}, {pipeline_mode = #tpu.pipeline_mode<synchronous>, transform_indices = @transform_3, window_bounds = array<i64: 256, 256>}, {pipeline_mode = #tpu.pipeline_mode<synchronous>, transform_indices = @transform_4, window_bounds = array<i64: 1, 256>}, {pipeline_mode = #tpu.pipeline_mode<synchronous>, transform_indices = @transform_5, window_bounds = array<i64: 1, 256>}, {pipeline_mode = #tpu.pipeline_mode<synchronous>, transform_indices = @transform_6, window_bounds = array<i64: 1, 1>}, {transform_indices = @transform_7, window_bounds = array<i64: 8, 1>}]} {
    %c0 = arith.constant 0 : index
    %c0_0 = arith.constant 0 : index
    %0 = vector.load %arg1[%c0, %c0_0] : memref<8x16xf32, #tpu.memory_space<vmem>>, vector<8x16xf32>
    %c0_1 = arith.constant 0 : index
    %c0_2 = arith.constant 0 : index
    %1 = vector.load %arg2[%c0_1, %c0_2] : memref<16x256xf32, #tpu.memory_space<vmem>>, vector<16x256xf32>
    %cst = arith.constant dense<0.000000e+00> : vector<8x256xf32>
    %2 = tpu.matmul %0, %1, %cst {dimension_numbers = #tpu.dot_dimension_numbers<[1], [0], [0], [1], [0, 0, 1, 1], [], []>} : vector<8x16xf32>, vector<16x256xf32>, vector<8x256xf32> -> vector<8x256xf32>
    %c0_3 = arith.constant 0 : index
    %c0_4 = arith.constant 0 : index
    %3 = vector.load %arg3[%c0_3, %c0_4] : memref<1x256xf32, #tpu.memory_space<vmem>>, vector<1x256xf32>
    %4 = vector.broadcast %3 : vector<1x256xf32> to vector<8x256xf32>
    %5 = arith.addf %2, %4 : vector<8x256xf32>
    %cst_5 = arith.constant 0.000000e+00 : f32
    %6 = vector.broadcast %cst_5 : f32 to vector<8x256xf32>
    %7 = arith.maximumf %5, %6 : vector<8x256xf32>
    %c0_6 = arith.constant 0 : index
    %c0_7 = arith.constant 0 : index
    %8 = vector.load %arg4[%c0_6, %c0_7] : memref<256x256xf32, #tpu.memory_space<vmem>>, vector<256x256xf32>
    %cst_8 = arith.constant dense<0.000000e+00> : vector<8x256xf32>
    %9 = tpu.matmul %7, %8, %cst_8 {dimension_numbers = #tpu.dot_dimension_numbers<[1], [0], [0], [1], [0, 0, 1, 1], [], []>} : vector<8x256xf32>, vector<256x256xf32>, vector<8x256xf32> -> vector<8x256xf32>
    %c0_9 = arith.constant 0 : index
    %c0_10 = arith.constant 0 : index
    %10 = vector.load %arg5[%c0_9, %c0_10] : memref<1x256xf32, #tpu.memory_space<vmem>>, vector<1x256xf32>
    %11 = vector.broadcast %10 : vector<1x256xf32> to vector<8x256xf32>
    %12 = arith.addf %9, %11 : vector<8x256xf32>
    %cst_11 = arith.constant 0.000000e+00 : f32
    %13 = vector.broadcast %cst_11 : f32 to vector<8x256xf32>
    %14 = arith.maximumf %12, %13 : vector<8x256xf32>
    %c0_12 = arith.constant 0 : index
    %c0_13 = arith.constant 0 : index
    %15 = vector.load %arg6[%c0_12, %c0_13] : memref<1x256xf32, #tpu.memory_space<vmem>>, vector<1x256xf32>
    %16 = vector.broadcast %15 : vector<1x256xf32> to vector<8x256xf32>
    %17 = arith.mulf %14, %16 : vector<8x256xf32>
    %cst_14 = arith.constant dense<0.000000e+00> : vector<8xf32>
    %18 = vector.multi_reduction <add>, %17, %cst_14 [1] : vector<8x256xf32> to vector<8xf32>
    %19 = vector.shape_cast %18 : vector<8xf32> to vector<8x1xf32>
    %c0_15 = arith.constant 0 : index
    %c0_16 = arith.constant 0 : index
    %20 = vector.load %arg7[%c0_15, %c0_16] : memref<1x1xf32, #tpu.memory_space<vmem>>, vector<1x1xf32>
    %21 = vector.broadcast %20 : vector<1x1xf32> to vector<8x1xf32>
    %22 = arith.addf %19, %21 : vector<8x1xf32>
    %c0_17 = arith.constant 0 : index
    %c0_18 = arith.constant 0 : index
    %23 = vector.load %arg8[%c0_17, %c0_18] : memref<8x1xf32, #tpu.memory_space<vmem>>, vector<8x1xf32>
    tpu.vector_store %arg8[%c0_17, %c0_18], %22 {strides = array<i32>} : memref<8x1xf32, #tpu.memory_space<vmem>>, vector<8x1xf32>,
    return
  }
  func.func @transform_0(%arg0: i32) -> (i32, i32) {
    %c0_i32 = arith.constant 0 : i32
    %c0_i32_0 = arith.constant 0 : i32
    return %arg0, %c0_i32 : i32, i32
  }
  func.func @transform_1(%arg0: i32) -> (i32, i32) {
    %c0_i32 = arith.constant 0 : i32
    %c0_i32_0 = arith.constant 0 : i32
    %c0_i32_1 = arith.constant 0 : i32
    return %c0_i32, %c0_i32_0 : i32, i32
  }
  func.func @transform_2(%arg0: i32) -> (i32, i32) {
    %c0_i32 = arith.constant 0 : i32
    %c0_i32_0 = arith.constant 0 : i32
    %c0_i32_1 = arith.constant 0 : i32
    return %c0_i32, %c0_i32_0 : i32, i32
  }
  func.func @transform_3(%arg0: i32) -> (i32, i32) {
    %c0_i32 = arith.constant 0 : i32
    %c0_i32_0 = arith.constant 0 : i32
    %c0_i32_1 = arith.constant 0 : i32
    return %c0_i32, %c0_i32_0 : i32, i32
  }
  func.func @transform_4(%arg0: i32) -> (i32, i32) {
    %c0_i32 = arith.constant 0 : i32
    %c0_i32_0 = arith.constant 0 : i32
    %c0_i32_1 = arith.constant 0 : i32
    return %c0_i32, %c0_i32_0 : i32, i32
  }
  func.func @transform_5(%arg0: i32) -> (i32, i32) {
    %c0_i32 = arith.constant 0 : i32
    %c0_i32_0 = arith.constant 0 : i32
    %c0_i32_1 = arith.constant 0 : i32
    return %c0_i32, %c0_i32_0 : i32, i32
  }
  func.func @transform_6(%arg0: i32) -> (i32, i32) {
    %c0_i32 = arith.constant 0 : i32
    %c0_i32_0 = arith.constant 0 : i32
    %c0_i32_1 = arith.constant 0 : i32
    return %c0_i32, %c0_i32_0 : i32, i32
  }
  func.func @transform_7(%arg0: i32) -> (i32, i32) {
    %c0_i32 = arith.constant 0 : i32
    %c0_i32_0 = arith.constant 0 : i32
    return %arg0, %c0_i32 : i32, i32
  }
}

</mosaic_0001>

<llo_original>
// kernel: tpu_custom_call.1
$region0: #{tpu_custom_call.1}
  #allocation0 [shape = 'u32[]', space=smem, size = 0x4, offset = 0x4, fixed_abs, tag = 'smem constant byte address 0x4 - core index']
  #allocation1 [shape = 'u32[144,128]{1,0:T(1,128)}', space=vmem, size = 0x12000, scoped, tag = 'internal scratch']
  #allocation2 [shape = 'f32[1,1]{1,0:T(1,128)S(1)}', space=vmem, size = 0x200, scoped, tag = 'scoped memory for tpu_custom_call.1']
  %s0 = inlined_call_operand.hbm [shape: f32[8,16], index: 0, kind: input, shape index: {}]
  %s1 = inlined_call_operand.hbm [shape: f32[16,256], index: 1, kind: input, shape index: {}]
  %s2 = inlined_call_operand.vmem [shape: f32[1,256], index: 2, kind: input, shape index: {}]
  %s3 = inlined_call_operand.hbm [shape: f32[256,256], index: 3, kind: input, shape index: {}]
  %s4 = inlined_call_operand.vmem [shape: f32[1,256], index: 4, kind: input, shape index: {}]
  %s5 = inlined_call_operand.vmem [shape: f32[1,256], index: 5, kind: input, shape index: {}]
  %s6 = inlined_call_operand.<no memory space> [shape: f32[1,1], index: 6, kind: input, shape index: {}]
  %s7 = inlined_call_operand.vmem [shape: f32[8,1], index: 7, kind: output, shape index: {}]
  %s8 = sld [smem:[#allocation0]]
  $region50: #{tpu_custom_call.1} parent=0
    _
  %s10 = ssub.s32 1, %s8
  %s11 = scalar_select 0, %s10, %s8
  %v12 = vstv %s6
  %13 = vst [vmem:[#allocation2] sm:$0x1] %v12
  $region1: #{tpu_custom_call.1} parent=0
    #allocation3 [shape = 'u8[4096]{0}', space=vmem, size = 0x1000, scoped, tag = 'input window, operand 0, single buffered']
    #allocation4 [shape = 's32[1]{0}', space=sflag, size = 0x4, scoped, tag = 'scoped memory for tpu_custom_call.1']
    #allocation5 [shape = 'u8[16384]{0}', space=vmem, size = 0x4000, scoped, tag = 'input window, operand 1, single buffered']
    #allocation6 [shape = 's32[1]{0}', space=sflag, size = 0x4, scoped, tag = 'scoped memory for tpu_custom_call.1']
    #allocation7 [shape = 'u8[262144]{0}', space=vmem, size = 0x40000, scoped, tag = 'input window, operand 3, single buffered']
    %14 = vsyncpa [#allocation4], 0
    %15 = vsyncpa [#allocation6], 0
    // Predicated region
    $region2: #{tpu_custom_call.1} parent=1 // pred_check
      _
    $region3: #{tpu_custom_call.1} parent=1 // pred_check_branch
      %17 = sbr.rel (0) target = $region5
    $region4: #{tpu_custom_call.1} parent=1 // pred_region
      %s19 = ssub.s32 128, 128
      %20 = vsyncadd [#allocation4], %s19
      %s22 = sshll.u32 [#allocation3], 4
      %s23 = int_to_ptr.vmem [resolvable:$true] %s22
      %25 = dma.hbm_to_vmem [thread:$0]  %s0, 128, %s23, [#allocation4]
    $region5: #{tpu_custom_call.1} parent=1 // pred_fallthru
      _
    // Predicated region
    $region6: #{tpu_custom_call.1} parent=1 // pred_check
      _
    $region7: #{tpu_custom_call.1} parent=1 // pred_check_branch
      %27 = sbr.rel (0) target = $region9
    $region8: #{tpu_custom_call.1} parent=1 // pred_region
      %s29 = ssub.s32 512, 512
      %30 = vsyncadd [#allocation6], %s29
      %s31 = sshll.u32 [#allocation5], 4
      %s32 = int_to_ptr.vmem [resolvable:$true] %s31
      %37 = dma.hbm_to_vmem [thread:$0]  %s1, 512, %s32, [#allocation6], 256, 256, 16
    $region9: #{tpu_custom_call.1} parent=1 // pred_fallthru
      _
    // Predicated region
    $region10: #{tpu_custom_call.1} parent=1 // pred_check
      _
    $region11: #{tpu_custom_call.1} parent=1 // pred_check_branch
      %39 = sbr.rel (0) target = $region13
    $region12: #{tpu_custom_call.1} parent=1 // pred_region
      _
    $region13: #{tpu_custom_call.1} parent=1 // pred_fallthru
      _
    // Predicated region
    $region14: #{tpu_custom_call.1} parent=1 // pred_check
      _
    $region15: #{tpu_custom_call.1} parent=1 // pred_check_branch
      %41 = sbr.rel (0) target = $region17
    $region16: #{tpu_custom_call.1} parent=1 // pred_region
      %s43 = ssub.s32 8192, 8192
      %44 = vsyncadd [#allocation6], %s43
      %s45 = sshll.u32 [#allocation7], 4
      %s46 = int_to_ptr.vmem [resolvable:$true] %s45
      %51 = dma.hbm_to_vmem [thread:$0]  %s3, 8192, %s46, [#allocation6], 256, 256, 16
    $region17: #{tpu_custom_call.1} parent=1 // pred_fallthru
      _
    // Predicated region
    $region18: #{tpu_custom_call.1} parent=1 // pred_check
      _
    $region19: #{tpu_custom_call.1} parent=1 // pred_check_branch
      %53 = sbr.rel (0) target = $region21
    $region20: #{tpu_custom_call.1} parent=1 // pred_region
      _
    $region21: #{tpu_custom_call.1} parent=1 // pred_fallthru
      _
    // Predicated region
    $region22: #{tpu_custom_call.1} parent=1 // pred_check
      _
    $region23: #{tpu_custom_call.1} parent=1 // pred_check_branch
      %55 = sbr.rel (0) target = $region25
    $region24: #{tpu_custom_call.1} parent=1 // pred_region
      _
    $region25: #{tpu_custom_call.1} parent=1 // pred_fallthru
      _
    // Predicated region
    $region26: #{tpu_custom_call.1} parent=1 // pred_check
      _
    $region27: #{tpu_custom_call.1} parent=1 // pred_check_branch
      %57 = sbr.rel (0) target = $region29
    $region28: #{tpu_custom_call.1} parent=1 // pred_region
      _
    $region29: #{tpu_custom_call.1} parent=1 // pred_fallthru
      _
    // Predicated region
    $region30: #{tpu_custom_call.1} parent=1 // pred_check
      _
    $region31: #{tpu_custom_call.1} parent=1 // pred_check_branch
      %59 = sbr.rel (0) target = $region33
    $region32: #{tpu_custom_call.1} parent=1 // pred_region
      %60 = dma.done [#allocation4], 128
    $region33: #{tpu_custom_call.1} parent=1 // pred_fallthru
      _
    // Predicated region
    $region34: #{tpu_custom_call.1} parent=1 // pred_check
      _
    $region35: #{tpu_custom_call.1} parent=1 // pred_check_branch
      %62 = sbr.rel (0) target = $region37
    $region36: #{tpu_custom_call.1} parent=1 // pred_region
      %63 = dma.done [#allocation6], 512
    $region37: #{tpu_custom_call.1} parent=1 // pred_fallthru
      _
    // Predicated region
    $region38: #{tpu_custom_call.1} parent=1 // pred_check
      _
    $region39: #{tpu_custom_call.1} parent=1 // pred_check_branch
      %65 = sbr.rel (0) target = $region41
    $region40: #{tpu_custom_call.1} parent=1 // pred_region
      %66 = dma.done [#allocation6], 8192
    $region41: #{tpu_custom_call.1} parent=1 // pred_fallthru
      _
    %v67 = vld [vmem:[#allocation3] sm:$0xff]
    %v68 = vld [vmem:[#allocation5] sm:$0xff]
    %v69 = vld [vmem:[#allocation5 + $0x8] sm:$0xff]
    %v70 = vld [vmem:[#allocation5 + $0x10] sm:$0xff]
    %v71 = vld [vmem:[#allocation5 + $0x18] sm:$0xff]
    %v72 = vld [vmem:[%s2] sm:$0x3]
    %v74 = vlaneseq
    %v75 = vshrl.u32 %v74, 7
    %v76 = vsub.s32 0, %v75
    %v77 = vrot.slane %v72, %v76
    %v78 = vlaneseq
    %v79 = vshrl.u32 %v78, 7
    %v80 = vsub.s32 1, %v79
    %v81 = vrot.slane %v72, %v80
    %vm84 = vcmask 130048
    %v86 = vsel %vm84, %v67, 0
    %88 = vmatprep.subr.mxu0 0.0
    %89 = vmatpush1.msra.mxu0 0.0
    %90 = vmatprep.subr.mxu0 0.0
    %91 = vmatpush1.msra.mxu0 0.0
    %92 = vmatprep.subr.mxu0 0.0
    %93 = vmatpush1.msra.mxu0 0.0
    %94 = vmatprep.subr.mxu0 0.0
    %95 = vmatpush1.msra.mxu0 0.0
    %96 = vmatprep.subr.mxu0 0.0
    %97 = vmatpush1.msra.mxu0 0.0
    %98 = vmatprep.subr.mxu0 0.0
    %99 = vmatpush1.msra.mxu0 0.0
    %100 = vmatprep.subr.mxu0 0.0
    %101 = vmatpush1.msra.mxu0 0.0
    %102 = vmatprep.subr.mxu0 0.0
    %103 = vmatpush1.msra.mxu0 0.0
    %104 = vmatprep.subr.mxu0 0.0
    %105 = vmatpush1.msra.mxu0 0.0
    %106 = vmatprep.subr.mxu0 0.0
    %107 = vmatpush1.msra.mxu0 0.0
    %108 = vmatprep.subr.mxu0 0.0
    %109 = vmatpush1.msra.mxu0 0.0
    %110 = vmatprep.subr.mxu0 0.0
    %111 = vmatpush1.msra.mxu0 0.0
    %112 = vmatprep.subr.mxu0 0.0
    %113 = vmatpush1.msra.mxu0 0.0
    %114 = vmatprep.subr.mxu0 0.0
    %115 = vmatpush1.msra.mxu0 0.0
    %116 = vmatprep.subr.mxu0 %v71
    %117 = vmatpush1.msra.mxu0 %v70
    %118 = vmatprep.subr.mxu0 %v69
    %119 = vmatpush1.msra.mxu0 %v68
    %120 = vmatprep.subr.mxu0 0.0
    %121 = vmatpush2.msra.mxu0 0.0
    %122 = vmatprep.subr.mxu0 0.0
    %123 = vmatpush2.msra.mxu0 0.0
    %124 = vmatprep.subr.mxu0 0.0
    %125 = vmatpush2.msra.mxu0 0.0
    %126 = vmatprep.subr.mxu0 0.0
    %127 = vmatpush2.msra.mxu0 0.0
    %128 = vmatprep.subr.mxu0 0.0
    %129 = vmatpush2.msra.mxu0 0.0
    %130 = vmatprep.subr.mxu0 0.0
    %131 = vmatpush2.msra.mxu0 0.0
    %132 = vmatprep.subr.mxu0 0.0
    %133 = vmatpush2.msra.mxu0 0.0
    %134 = vmatprep.subr.mxu0 0.0
    %135 = vmatpush2.msra.mxu0 0.0
    %136 = vmatprep.subr.mxu0 0.0
    %137 = vmatpush2.msra.mxu0 0.0
    %138 = vmatprep.subr.mxu0 0.0
    %139 = vmatpush2.msra.mxu0 0.0
    %140 = vmatprep.subr.mxu0 0.0
    %141 = vmatpush2.msra.mxu0 0.0
    %142 = vmatprep.subr.mxu0 0.0
    %143 = vmatpush2.msra.mxu0 0.0
    %144 = vmatprep.subr.mxu0 0.0
    %145 = vmatpush2.msra.mxu0 0.0
    %146 = vmatprep.subr.mxu0 0.0
    %147 = vmatpush2.msra.mxu0 0.0
    %148 = vmatprep.subr.mxu0 0.0
    %149 = vmatpush2.msra.mxu0 0.0
    %150 = vmatprep.subr.mxu0 0.0
    %151 = vmatpush2.msra.mxu0 0.0
    %152 = vmatprep.mubr.f32.mxu0 0.0
    %153 = vmatmul.mubr.f32.gmra.mxu0 %v86
    %v154 = vpop.f32.mrf.mxu0
    %v155 = vadd.f32 %v77, %v154
    %v156 = vpop.f32.mrf.mxu0
    %v157 = vadd.f32 %v81, %v156
    %158 = vdwg.mxu0
    %v159 = vmax.f32 %v155, 0.0
    %v160 = vmax.f32 %v157, 0.0
    %v161 = vld [vmem:[#allocation7] sm:$0xff]
    %v162 = vld [vmem:[#allocation7 + $0x8] sm:$0xff]
    %v163 = vld [vmem:[#allocation7 + $0x10] sm:$0xff]
    %v164 = vld [vmem:[#allocation7 + $0x18] sm:$0xff]
    %v165 = vld [vmem:[#allocation7 + $0x20] sm:$0xff]
    %v166 = vld [vmem:[#allocation7 + $0x28] sm:$0xff]
    %v167 = vld [vmem:[#allocation7 + $0x30] sm:$0xff]
    %v168 = vld [vmem:[#allocation7 + $0x38] sm:$0xff]
    %v169 = vld [vmem:[#allocation7 + $0x40] sm:$0xff]
    %v170 = vld [vmem:[#allocation7 + $0x48] sm:$0xff]
    %v171 = vld [vmem:[#allocation7 + $0x50] sm:$0xff]
    %v172 = vld [vmem:[#allocation7 + $0x58] sm:$0xff]
    %v173 = vld [vmem:[#allocation7 + $0x60] sm:$0xff]
    %v174 = vld [vmem:[#allocation7 + $0x68] sm:$0xff]
    %v175 = vld [vmem:[#allocation7 + $0x70] sm:$0xff]
    %v176 = vld [vmem:[#allocation7 + $0x78] sm:$0xff]
    %v177 = vld [vmem:[#allocation7 + $0x80] sm:$0xff]
    %v178 = vld [vmem:[#allocation7 + $0x88] sm:$0xff]
    %v179 = vld [vmem:[#allocation7 + $0x90] sm:$0xff]
    %v180 = vld [vmem:[#allocation7 + $0x98] sm:$0xff]
    %v181 = vld [vmem:[#allocation7 + $0xa0] sm:$0xff]
    %v182 = vld [vmem:[#allocation7 + $0xa8] sm:$0xff]
    %v183 = vld [vmem:[#allocation7 + $0xb0] sm:$0xff]
    %v184 = vld [vmem:[#allocation7 + $0xb8] sm:$0xff]
    %v185 = vld [vmem:[#allocation7 + $0xc0] sm:$0xff]
    %v186 = vld [vmem:[#allocation7 + $0xc8] sm:$0xff]
    %v187 = vld [vmem:[#allocation7 + $0xd0] sm:$0xff]
    %v188 = vld [vmem:[#allocation7 + $0xd8] sm:$0xff]
    %v189 = vld [vmem:[#allocation7 + $0xe0] sm:$0xff]
    %v190 = vld [vmem:[#allocation7 + $0xe8] sm:$0xff]
    %v191 = vld [vmem:[#allocation7 + $0xf0] sm:$0xff]
    %v192 = vld [vmem:[#allocation7 + $0xf8] sm:$0xff]
    %v193 = vld [vmem:[#allocation7 + $0x100] sm:$0xff]
    %v194 = vld [vmem:[#allocation7 + $0x108] sm:$0xff]
    %v195 = vld [vmem:[#allocation7 + $0x110] sm:$0xff]
    %v196 = vld [vmem:[#allocation7 + $0x118] sm:$0xff]
    %v197 = vld [vmem:[#allocation7 + $0x120] sm:$0xff]
    %v198 = vld [vmem:[#allocation7 + $0x128] sm:$0xff]
    %v199 = vld [vmem:[#allocation7 + $0x130] sm:$0xff]
    %v200 = vld [vmem:[#allocation7 + $0x138] sm:$0xff]
    %v201 = vld [vmem:[#allocation7 + $0x140] sm:$0xff]
    %v202 = vld [vmem:[#allocation7 + $0x148] sm:$0xff]
    %v203 = vld [vmem:[#allocation7 + $0x150] sm:$0xff]
    %v204 = vld [vmem:[#allocation7 + $0x158] sm:$0xff]
    %v205 = vld [vmem:[#allocation7 + $0x160] sm:$0xff]
    %v206 = vld [vmem:[#allocation7 + $0x168] sm:$0xff]
    %v207 = vld [vmem:[#allocation7 + $0x170] sm:$0xff]
    %v208 = vld [vmem:[#allocation7 + $0x178] sm:$0xff]
    %v209 = vld [vmem:[#allocation7 + $0x180] sm:$0xff]
    %v210 = vld [vmem:[#allocation7 + $0x188] sm:$0xff]
    %v211 = vld [vmem:[#allocation7 + $0x190] sm:$0xff]
    %v212 = vld [vmem:[#allocation7 + $0x198] sm:$0xff]
    %v213 = vld [vmem:[#allocation7 + $0x1a0] sm:$0xff]
    %v214 = vld [vmem:[#allocation7 + $0x1a8] sm:$0xff]
    %v215 = vld [vmem:[#allocation7 + $0x1b0] sm:$0xff]
    %v216 = vld [vmem:[#allocation7 + $0x1b8] sm:$0xff]
    %v217 = vld [vmem:[#allocation7 + $0x1c0] sm:$0xff]
    %v218 = vld [vmem:[#allocation7 + $0x1c8] sm:$0xff]
    %v219 = vld [vmem:[#allocation7 + $0x1d0] sm:$0xff]
    %v220 = vld [vmem:[#allocation7 + $0x1d8] sm:$0xff]
    %v221 = vld [vmem:[#allocation7 + $0x1e0] sm:$0xff]
    %v222 = vld [vmem:[#allocation7 + $0x1e8] sm:$0xff]
    %v223 = vld [vmem:[#allocation7 + $0x1f0] sm:$0xff]
    %v224 = vld [vmem:[#allocation7 + $0x1f8] sm:$0xff]
    %v225 = vld [vmem:[%s4] sm:$0x3]
    %v227 = vlaneseq
    %v228 = vshrl.u32 %v227, 7
    %v229 = vsub.s32 0, %v228
    %v230 = vrot.slane %v225, %v229
    %v231 = vlaneseq
    %v232 = vshrl.u32 %v231, 7
    %v233 = vsub.s32 1, %v232
    %v234 = vrot.slane %v225, %v233
    %237 = vmatprep.subr.mxu0 %v192
    %238 = vmatpush1.msra.mxu0 %v191
    %239 = vmatprep.subr.mxu0 %v190
    %240 = vmatpush1.msra.mxu0 %v189
    %241 = vmatprep.subr.mxu0 %v188
    %242 = vmatpush1.msra.mxu0 %v187
    %243 = vmatprep.subr.mxu0 %v186
    %244 = vmatpush1.msra.mxu0 %v185
    %245 = vmatprep.subr.mxu0 %v184
    %246 = vmatpush1.msra.mxu0 %v183
    %247 = vmatprep.subr.mxu0 %v182
    %248 = vmatpush1.msra.mxu0 %v181
    %249 = vmatprep.subr.mxu0 %v180
    %250 = vmatpush1.msra.mxu0 %v179
    %251 = vmatprep.subr.mxu0 %v178
    %252 = vmatpush1.msra.mxu0 %v177
    %253 = vmatprep.subr.mxu0 %v176
    %254 = vmatpush1.msra.mxu0 %v175
    %255 = vmatprep.subr.mxu0 %v174
    %256 = vmatpush1.msra.mxu0 %v173
    %257 = vmatprep.subr.mxu0 %v172
    %258 = vmatpush1.msra.mxu0 %v171
    %259 = vmatprep.subr.mxu0 %v170
    %260 = vmatpush1.msra.mxu0 %v169
    %261 = vmatprep.subr.mxu0 %v168
    %262 = vmatpush1.msra.mxu0 %v167
    %263 = vmatprep.subr.mxu0 %v166
    %264 = vmatpush1.msra.mxu0 %v165
    %265 = vmatprep.subr.mxu0 %v164
    %266 = vmatpush1.msra.mxu0 %v163
    %267 = vmatprep.subr.mxu0 %v162
    %268 = vmatpush1.msra.mxu0 %v161
    %269 = vmatprep.subr.mxu0 %v224
    %270 = vmatpush2.msra.mxu0 %v223
    %271 = vmatprep.subr.mxu0 %v222
    %272 = vmatpush2.msra.mxu0 %v221
    %273 = vmatprep.subr.mxu0 %v220
    %274 = vmatpush2.msra.mxu0 %v219
    %275 = vmatprep.subr.mxu0 %v218
    %276 = vmatpush2.msra.mxu0 %v217
    %277 = vmatprep.subr.mxu0 %v216
    %278 = vmatpush2.msra.mxu0 %v215
    %279 = vmatprep.subr.mxu0 %v214
    %280 = vmatpush2.msra.mxu0 %v213
    %281 = vmatprep.subr.mxu0 %v212
    %282 = vmatpush2.msra.mxu0 %v211
    %283 = vmatprep.subr.mxu0 %v210
    %284 = vmatpush2.msra.mxu0 %v209
    %285 = vmatprep.subr.mxu0 %v208
    %286 = vmatpush2.msra.mxu0 %v207
    %287 = vmatprep.subr.mxu0 %v206
    %288 = vmatpush2.msra.mxu0 %v205
    %289 = vmatprep.subr.mxu0 %v204
    %290 = vmatpush2.msra.mxu0 %v203
    %291 = vmatprep.subr.mxu0 %v202
    %292 = vmatpush2.msra.mxu0 %v201
    %293 = vmatprep.subr.mxu0 %v200
    %294 = vmatpush2.msra.mxu0 %v199
    %295 = vmatprep.subr.mxu0 %v198
    %296 = vmatpush2.msra.mxu0 %v197
    %297 = vmatprep.subr.mxu0 %v196
    %298 = vmatpush2.msra.mxu0 %v195
    %299 = vmatprep.subr.mxu0 %v194
    %300 = vmatpush2.msra.mxu0 %v193
    %301 = vmatprep.mubr.f32.mxu0 %v160
    %302 = vmatmul.mubr.f32.gmra.mxu0 %v159
    %v303 = vpop.f32.mrf.mxu0
    %v304 = vadd.f32 %v230, %v303
    %v305 = vpop.f32.mrf.mxu0
    %v306 = vadd.f32 %v234, %v305
    %307 = vdwg.mxu0
    %v308 = vmax.f32 %v304, 0.0
    %v309 = vmax.f32 %v306, 0.0
    %v310 = vld [vmem:[%s5] sm:$0x3]
    %v312 = vlaneseq
    %v313 = vshrl.u32 %v312, 7
    %v314 = vsub.s32 0, %v313
    %v315 = vrot.slane %v310, %v314
    %v316 = vlaneseq
    %v317 = vshrl.u32 %v316, 7
    %v318 = vsub.s32 1, %v317
    %v319 = vrot.slane %v310, %v318
    %v322 = vmul.f32 %v308, %v315
    %v323 = vmul.f32 %v309, %v319
    %v324 = vadd.f32 %v322, %v323
    %325 = vadd.xlane.f32.xlu0 %v324
    %v326 = vpop.xlane.xlu0 %325
    %v327 = vld [vmem:[#allocation2] sm:$0x1]
    %v329 = vlaneseq
    %v330 = vshrl.u32 %v329, 7
    %v331 = vsub.s32 0, %v330
    %v332 = vrot.slane %v327, %v331
    %v334 = vadd.f32 %v326, %v332
    %vm335 = vcmask 7168
    %336 = vst.msk [vmem:[%s7] sm:$0xff] %vm335, %v334
    // Predicated region
    $region42: #{tpu_custom_call.1} parent=1 // pred_check
      _
    $region43: #{tpu_custom_call.1} parent=1 // pred_check_branch
      %338 = sbr.rel (0) target = $region45
    $region44: #{tpu_custom_call.1} parent=1 // pred_region
      _
    $region45: #{tpu_custom_call.1} parent=1 // pred_fallthru
      _
    // Predicated region
    $region46: #{tpu_custom_call.1} parent=1 // pred_check
      _
    $region47: #{tpu_custom_call.1} parent=1 // pred_check_branch
      %340 = sbr.rel (0) target = $region49
    $region48: #{tpu_custom_call.1} parent=1 // pred_region
      _
    $region49: #{tpu_custom_call.1} parent=1 // pred_fallthru
      _
    %341 = vsyncpa [#allocation4], 1
    %342 = vsyncpa [#allocation6], 1

</llo_original>
